<compile_context>
chip_gen: v5e
topology: v5e:2x2
jax: 0.10.0
libtpu: 0.0.40
codegen_flags: <defaults>
</compile_context>

<pallas_src>
import functools

import numpy as np
import jax
import jax.numpy as jnp
from jax.experimental import pallas as pl
from jax.experimental.pallas import tpu as pltpu


def _round_up(x, m):
    return ((x + m - 1) // m) * m


# ----------------------------------------------------------------------------
# Parameter / path construction (mirrors DDT.__init__ for integer `leaves`)
# ----------------------------------------------------------------------------
def build_path_matrices(depth):
    """Replicates DDT.init_paths for integer leaf_init_information."""
    n_nodes = 2 ** depth - 1
    n_leaves = 2 ** depth
    left = np.zeros((n_nodes, n_leaves), dtype=np.float32)
    for n in range(depth):
        row = 2 ** n - 1
        for i in range(n_leaves):
            col = 2 ** (depth - n) * i
            end_col = col + 2 ** (depth - 1 - n)
            if row + i >= n_nodes or end_col >= n_leaves:
                break
            left[row + i, col:end_col] = 1.0
    right = np.zeros((n_nodes, n_leaves), dtype=np.float32)
    left_turns = np.where(left == 1)
    for row in np.unique(left_turns[0]):
        cols = left_turns[1][left_turns[0] == row]
        start = cols[-1] + 1
        end = start + len(cols)
        right[row, start:end] = 1.0
    return left, right


def build_ddt_params(input_dim, output_dim, leaves, alpha=1.0, seed=0):
    """Deterministic synthetic parameter init matching DDT.__init__ shapes."""
    rng = np.random.default_rng(seed)
    depth = int(np.floor(np.log2(leaves)))
    n_nodes = 2 ** depth - 1
    n_leaves = 2 ** depth
    layers = rng.random((n_nodes, input_dim)).astype(np.float32)
    comparators = np.full((n_nodes, 1), 1.0 / input_dim, dtype=np.float32)
    action_probs = rng.uniform(0.0, 1.0, (n_leaves, output_dim)).astype(np.float32)
    left_ps, right_ps = build_path_matrices(depth)
    return dict(
        layers=jnp.asarray(layers),
        comparators=jnp.asarray(comparators),
        alpha=jnp.asarray([alpha], dtype=jnp.float32),
        left_path_sigs=jnp.asarray(left_ps),
        right_path_sigs=jnp.asarray(right_ps),
        action_probs=jnp.asarray(action_probs),
    )


# ----------------------------------------------------------------------------
# Pallas kernel: one batch tile per grid step.
#   zz        = x_aug @ W_ext              -> [ comp | -(comp @ R) ]   (one MXU matmul)
#   log_s     = log(sigmoid(comp))                                      (EUP)
#   log_probs = log_s @ (L + R) - comp @ R                              (one MXU matmul + add)
#   probs     = exp(log_probs); actions = probs @ action_probs          (small MXU matmul)
#   out       = softmax(actions) or actions                              (no lane mask needed)
# ----------------------------------------------------------------------------
def ddt_kernel(x_ref, wext_ref, g_ref, ap_ref, out_ref, *, n_nodes_p, is_value):
    x = x_ref[...]                                                      # (tb, D+1)
    zz = jnp.dot(x, wext_ref[...], preferred_element_type=jnp.float32)  # (tb, Np+Lfp)
    comp = zz[:, :n_nodes_p]            # alpha*(x@W.T - c); vreg-aligned lane slice (Np=128k)
    neg_comp_r = zz[:, n_nodes_p:]      # -(comp @ R), precomputed via W_ext

    # Numerically-stable log(sigmoid(comp)).
    log_s = jnp.minimum(comp, 0.0) - jnp.log(1.0 + jnp.exp(-jnp.abs(comp)))

    # log probs[b,l] = sum_n L[n,l]*log(s) + R[n,l]*log(1-s) = log_s @ (L+R) - comp @ R
    log_probs = (jnp.dot(log_s, g_ref[...], preferred_element_type=jnp.float32)
                 + neg_comp_r)
    probs = jnp.exp(log_probs)                                          # (tb, Lfp)

    actions = jnp.dot(probs, ap_ref[...], preferred_element_type=jnp.float32)  # (tb, O)

    if is_value:
        out_ref[...] = actions
    else:
        m = jnp.max(actions, axis=-1, keepdims=True)
        e = jnp.exp(actions - m)
        denom = jnp.sum(e, axis=-1, keepdims=True)
        out_ref[...] = e * pl.reciprocal(denom, approx=True)


# ----------------------------------------------------------------------------
# Wrapper: host-side (one-time) parameter prep + batch-tiled pallas_call.
# ----------------------------------------------------------------------------
def ddt_forward(x, params, is_value=False, tile_b=2048):
    x = x.astype(jnp.float32)
    B, D = x.shape
    layers = params["layers"].astype(jnp.float32)               # (N, D)
    N = layers.shape[0]
    action_probs = params["action_probs"].astype(jnp.float32)   # (Lf, O)
    Lf, O = action_probs.shape
    alpha = params["alpha"].astype(jnp.float32)[0]

    # Lane-dense padded sizes for the internal (node/leaf) matmul axes.
    Np = _round_up(N, 128)
    Lfp = _round_up(Lf, 128)
    NK = Np + Lfp

    # Batch tiling: multiple of 8 sublanes; keep >=2 grid steps when the batch allows
    # so the "parallel" axis feeds both TensorCores on v7x.
    Bp8 = _round_up(B, 8)
    tb = _round_up(max(8, min(tile_b, Bp8)), 8)
    if tb >= Bp8 and Bp8 >= 16:
        tb = _round_up((Bp8 + 1) // 2, 8)
    Bp = _round_up(B, tb)

    # ---- host-side parameter prep (loop-invariant; alpha & comparators folded) ----
    wt = jnp.pad((alpha * layers).T, ((0, 0), (0, Np - N)))                   # (D, Np)
    comp_row = jnp.pad(
        (alpha * params["comparators"].astype(jnp.float32)).reshape(1, N),
        ((0, 0), (0, Np - N)))                                                # (1, Np)
    L = jnp.pad(params["left_path_sigs"].astype(jnp.float32),
                ((0, Np - N), (0, Lfp - Lf)))                                 # (Np, Lfp)
    R = jnp.pad(params["right_path_sigs"].astype(jnp.float32),
                ((0, Np - N), (0, Lfp - Lf)))                                 # (Np, Lfp)
    G = L + R                                                                 # (Np, Lfp)
    WR = wt @ R                                                               # (D, Lfp)
    crR = comp_row @ R                                                        # (1, Lfp)
    # x_aug @ W_ext = [ x@wt - comp_row | -(x@WR) + crR ] = [ comp | -(comp @ R) ]
    W_ext = jnp.concatenate(
        [jnp.concatenate([wt, -WR], axis=1),
         jnp.concatenate([-comp_row, crR], axis=1)], axis=0)                  # (D+1, NK)
    ap = jnp.pad(action_probs, ((0, Lfp - Lf), (0, 0)))                       # (Lfp, O)

    x_aug = jnp.concatenate([x, jnp.ones((B, 1), jnp.float32)], axis=1)       # (B, D+1)
    x_aug = jnp.pad(x_aug, ((0, Bp - B), (0, 0)))                             # (Bp, D+1)

    # ---- explicit VMEM budget (scoped default is 16 MiB on v5e; v7x physical is 64 MiB) ----
    f32 = 4
    param_bytes = ((D + 1) * NK + Np * Lfp + Lfp * O) * f32
    io_bytes = 2 * (tb * (D + 1) + tb * max(O, 128)) * f32   # double-buffered x / out tiles
    live_bytes = 10 * tb * NK * f32                          # generous bound on live temporaries
    vmem_limit = int(min(max(2 * param_bytes + io_bytes + live_bytes, 16 * 2 ** 20),
                         64 * 2 ** 20))

    const = lambda i: (0, 0)
    out_padded = pl.pallas_call(
        functools.partial(ddt_kernel, n_nodes_p=Np, is_value=is_value),
        out_shape=jax.ShapeDtypeStruct((Bp, O), jnp.float32),   # unpadded output columns
        grid=(Bp // tb,),
        in_specs=[
            pl.BlockSpec((tb, D + 1), lambda i: (i, 0)),   # x_aug: streamed per batch tile
            pl.BlockSpec((D + 1, NK), const),              # fused weight/bias matrix: resident
            pl.BlockSpec((Np, Lfp), const),                # G = L + R: resident
            pl.BlockSpec((Lfp, O), const),                 # leaf action probs: resident
        ],
        out_specs=pl.BlockSpec((tb, O), lambda i: (i, 0)),
        compiler_params=pltpu.CompilerParams(
            dimension_semantics=("parallel",),
            vmem_limit_bytes=vmem_limit,
        ),
    )(x_aug, W_ext, G, ap)

    return out_padded[:B]


# ----------------------------------------------------------------------------
# Pure-JAX reference (mirrors the PyTorch forward) for validation.
# ----------------------------------------------------------------------------
def ddt_ref(x, params, is_value=False):
    layers = params["layers"]
    z = x @ layers.T                                             # (B, N)
    comp = (z - params["comparators"].reshape(1, -1)) * params["alpha"][0]
    s = jax.nn.sigmoid(comp)                                     # (B, N)
    L = params["left_path_sigs"]
    R = params["right_path_sigs"]
    left_terms = s[:, :, None] * L[None] + (L[None] == 0).astype(jnp.float32)
    right_terms = (1.0 - s)[:, :, None] * R[None] + (R[None] == 0).astype(jnp.float32)
    probs = jnp.prod(left_terms * right_terms, axis=1)           # (B, Lf)
    actions = probs @ params["action_probs"]                     # (B, O)
    if is_value:
        return actions
    return jax.nn.softmax(actions, axis=-1)


if __name__ == "__main__":
    # Small deterministic setup: input_dim=8, output_dim=4, leaves=16
    # (depth 4 -> 15 internal nodes, 16 leaves), batch=16 with tile_b=8 so the
    # batch grid exercises 2 steps.
    input_dim, output_dim, leaves, batch = 8, 4, 16, 16

    params = build_ddt_params(input_dim, output_dim, leaves, alpha=1.0, seed=0)

    key = jax.random.PRNGKey(0)
    x = jax.random.normal(key, (batch, input_dim), dtype=jnp.float32)

    # value head (no softmax) — exact path-product math, tight tolerance.
    out_v = jax.block_until_ready(ddt_forward(x, params, is_value=True, tile_b=8))
    ref_v = ddt_ref(x, params, is_value=True)
    np.testing.assert_allclose(np.asarray(out_v), np.asarray(ref_v), rtol=1e-4, atol=1e-5)

    # policy head (softmax) — uses the approximate EUP reciprocal for the
    # normalization, so the tolerance is slightly looser.
    out = jax.block_until_ready(ddt_forward(x, params, is_value=False, tile_b=8))
    ref = ddt_ref(x, params, is_value=False)
    np.testing.assert_allclose(np.asarray(out), np.asarray(ref), rtol=5e-3, atol=1e-3)

    print("KERNEL_OK")
</pallas_src>

<mosaic_0001>
module attributes {stable_mosaic.version = 11 : i64} {
  func.func @ddt_kernel(%arg0: i32, %arg1: memref<8x9xf32, #tpu.memory_space<vmem>>, %arg2: memref<9x256xf32, #tpu.memory_space<vmem>>, %arg3: memref<128x128xf32, #tpu.memory_space<vmem>>, %arg4: memref<128x4xf32, #tpu.memory_space<vmem>>, %arg5: memref<8x4xf32, #tpu.memory_space<vmem>>) attributes {dimension_semantics = [#tpu.dimension_semantics<parallel>], iteration_bounds = array<i64: 2>, scalar_prefetch = 0 : i64, scratch_operands = 0 : i64, tpu.core_type = #tpu.core_type<tc>, window_params = [{transform_indices = @transform_0, window_bounds = array<i64: 8, 9>}, {pipeline_mode = #tpu.pipeline_mode<synchronous>, transform_indices = @transform_1, window_bounds = array<i64: 9, 256>}, {pipeline_mode = #tpu.pipeline_mode<synchronous>, transform_indices = @transform_2, window_bounds = array<i64: 128, 128>}, {pipeline_mode = #tpu.pipeline_mode<synchronous>, transform_indices = @transform_3, window_bounds = array<i64: 128, 4>}, {transform_indices = @transform_4, window_bounds = array<i64: 8, 4>}]} {
    %c0 = arith.constant 0 : index
    %c0_0 = arith.constant 0 : index
    %0 = vector.load %arg1[%c0, %c0_0] : memref<8x9xf32, #tpu.memory_space<vmem>>, vector<8x9xf32>
    %c0_1 = arith.constant 0 : index
    %c0_2 = arith.constant 0 : index
    %1 = vector.load %arg2[%c0_1, %c0_2] : memref<9x256xf32, #tpu.memory_space<vmem>>, vector<9x256xf32>
    %cst = arith.constant dense<0.000000e+00> : vector<8x256xf32>
    %2 = tpu.matmul %0, %1, %cst {dimension_numbers = #tpu.dot_dimension_numbers<[1], [0], [0], [1], [0, 0, 1, 1], [], []>} : vector<8x9xf32>, vector<9x256xf32>, vector<8x256xf32> -> vector<8x256xf32>
    %3 = vector.extract_strided_slice %2 {offsets = [0, 0], sizes = [8, 128], strides = [1, 1]} : vector<8x256xf32> to vector<8x128xf32>
    %4 = vector.extract_strided_slice %2 {offsets = [0, 128], sizes = [8, 128], strides = [1, 1]} : vector<8x256xf32> to vector<8x128xf32>
    %cst_3 = arith.constant 0.000000e+00 : f32
    %5 = vector.broadcast %cst_3 : f32 to vector<8x128xf32>
    %6 = arith.minimumf %3, %5 : vector<8x128xf32>
    %7 = math.absf %3 : vector<8x128xf32>
    %cst_4 = arith.constant 0.000000e+00 : f32
    %8 = vector.broadcast %cst_4 : f32 to vector<8x128xf32>
    %9 = arith.subf %8, %7 : vector<8x128xf32>
    %10 = math.exp %9 : vector<8x128xf32>
    %cst_5 = arith.constant 1.000000e+00 : f32
    %11 = vector.broadcast %cst_5 : f32 to vector<8x128xf32>
    %12 = arith.addf %11, %10 : vector<8x128xf32>
    %13 = math.log %12 : vector<8x128xf32>
    %14 = arith.subf %6, %13 : vector<8x128xf32>
    %c0_6 = arith.constant 0 : index
    %c0_7 = arith.constant 0 : index
    %15 = vector.load %arg3[%c0_6, %c0_7] : memref<128x128xf32, #tpu.memory_space<vmem>>, vector<128x128xf32>
    %cst_8 = arith.constant dense<0.000000e+00> : vector<8x128xf32>
    %16 = tpu.matmul %14, %15, %cst_8 {dimension_numbers = #tpu.dot_dimension_numbers<[1], [0], [0], [1], [0, 0, 1, 1], [], []>} : vector<8x128xf32>, vector<128x128xf32>, vector<8x128xf32> -> vector<8x128xf32>
    %17 = arith.addf %16, %4 : vector<8x128xf32>
    %18 = math.exp %17 : vector<8x128xf32>
    %c0_9 = arith.constant 0 : index
    %c0_10 = arith.constant 0 : index
    %19 = vector.load %arg4[%c0_9, %c0_10] : memref<128x4xf32, #tpu.memory_space<vmem>>, vector<128x4xf32>
    %cst_11 = arith.constant dense<0.000000e+00> : vector<8x4xf32>
    %20 = tpu.matmul %18, %19, %cst_11 {dimension_numbers = #tpu.dot_dimension_numbers<[1], [0], [0], [1], [0, 0, 1, 1], [], []>} : vector<8x128xf32>, vector<128x4xf32>, vector<8x4xf32> -> vector<8x4xf32>
    %c0_12 = arith.constant 0 : index
    %c0_13 = arith.constant 0 : index
    %21 = vector.load %arg5[%c0_12, %c0_13] : memref<8x4xf32, #tpu.memory_space<vmem>>, vector<8x4xf32>
    tpu.vector_store %arg5[%c0_12, %c0_13], %20 {strides = array<i32>} : memref<8x4xf32, #tpu.memory_space<vmem>>, vector<8x4xf32>,
    return
  }
  func.func @transform_0(%arg0: i32) -> (i32, i32) {
    %c0_i32 = arith.constant 0 : i32
    %c0_i32_0 = arith.constant 0 : i32
    return %arg0, %c0_i32 : i32, i32
  }
  func.func @transform_1(%arg0: i32) -> (i32, i32) {
    %c0_i32 = arith.constant 0 : i32
    %c0_i32_0 = arith.constant 0 : i32
    %c0_i32_1 = arith.constant 0 : i32
    return %c0_i32, %c0_i32_0 : i32, i32
  }
  func.func @transform_2(%arg0: i32) -> (i32, i32) {
    %c0_i32 = arith.constant 0 : i32
    %c0_i32_0 = arith.constant 0 : i32
    %c0_i32_1 = arith.constant 0 : i32
    return %c0_i32, %c0_i32_0 : i32, i32
  }
  func.func @transform_3(%arg0: i32) -> (i32, i32) {
    %c0_i32 = arith.constant 0 : i32
    %c0_i32_0 = arith.constant 0 : i32
    %c0_i32_1 = arith.constant 0 : i32
    return %c0_i32, %c0_i32_0 : i32, i32
  }
  func.func @transform_4(%arg0: i32) -> (i32, i32) {
    %c0_i32 = arith.constant 0 : i32
    %c0_i32_0 = arith.constant 0 : i32
    return %arg0, %c0_i32 : i32, i32
  }
}

</mosaic_0001>

<llo_original>
// kernel: tpu_custom_call.1
$region0: #{tpu_custom_call.1}
  #allocation0 [shape = 'u32[]', space=smem, size = 0x4, offset = 0x4, fixed_abs, tag = 'smem constant byte address 0x4 - core index']
  #allocation1 [shape = 'u32[72,128]{1,0:T(1,128)}', space=vmem, size = 0x9000, scoped, tag = 'internal scratch']
  %s0 = inlined_call_operand.hbm [shape: f32[16,9], index: 0, kind: input, shape index: {}]
  %s1 = inlined_call_operand.hbm [shape: f32[9,256], index: 1, kind: input, shape index: {}]
  %s2 = inlined_call_operand.vmem [shape: f32[128,128], index: 2, kind: input, shape index: {}]
  %s3 = inlined_call_operand.vmem [shape: f32[128,4], index: 3, kind: input, shape index: {}]
  %s4 = inlined_call_operand.vmem [shape: f32[16,4], index: 4, kind: output, shape index: {}]
  %s5 = sld [smem:[#allocation0]]
  $region57: #{tpu_custom_call.1} parent=0
    _
  %s7 = ssub.s32 1, %s5
  %s8 = scalar_select 0, %s7, %s5
  $region1: #{tpu_custom_call.1} parent=0
    #allocation2 [shape = 'u8[8192]{0}', space=vmem, size = 0x2000, scoped, tag = 'input window, operand 0']
    #allocation3 [shape = 's32[2]{0}', space=sflag, size = 0x8, scoped, tag = 'scoped memory for tpu_custom_call.1']
    #allocation4 [shape = 'u8[16384]{0}', space=vmem, size = 0x4000, scoped, tag = 'input window, operand 1, single buffered']
    #allocation5 [shape = 's32[1]{0}', space=sflag, size = 0x4, scoped, tag = 'scoped memory for tpu_custom_call.1']
    %9 = vsyncpa [#allocation3], 0
    %s10 = scalar_lea.sflag [#allocation3], 1
    %11 = vsyncpa %s10, 0
    %12 = vsyncpa [#allocation5], 0
    loop: start=0, step=1, limit=4
    $region2: #{tpu_custom_call.1} parent=1 // loop_pre_header
      _
    $region3: #{tpu_custom_call.1} parent=1 // loop_header
      %s14 = sphi 0, %s18
      %p15 = scmp.ge.s32.totalorder %s14, 4
      %s24 = sphi 0, %s26
      %s27 = sphi 0, %s24
      %s28 = sphi 0, %s27
      %s44 = sphi 0, %s28
      %s48 = sphi 0, %s48
      %s50 = sphi 0, %s48
      %s51 = sphi 0, %s50
      %s65 = sphi 0, %s51
      %s69 = sphi 0, %s69
      %s71 = sphi 0, %s69
      %s72 = sphi 0, %s71
      %s86 = sphi 0, %s72
      %s90 = sphi 0, %s90
      %s92 = sphi 0, %s90
      %s93 = sphi 0, %s92
      %s107 = sphi 0, %s93
      %s113 = sphi 0, %s115
      %s116 = sphi 0, %s113
      %s117 = sphi 0, %s116
      %s133 = sphi 0, %s117
    $region4: #{tpu_custom_call.1} parent=1 // loop_header_branch
      %17 = sbr.rel (%p15) target = $region8
    $region5: #{tpu_custom_call.1} parent=1 // loop_body
      %s19 = ssub.s32 %s14, 1
      %s20 = ssub.s32 %s14, 2
      %s21 = sadd.s32 %s14, 1
      %s22 = ssub.s32 %s14, %s21
      %p23 = scmp.eq.s32.totalorder %s22, 0
      %s25 = sadd.s32 %s24, 1
      %s26 = scalar_select %p23, %s24, %s25
      %p29 = pneg %p23
      %p30 = scmp.eq.s32.totalorder %s14, 1
      %p31 = por %p29, %p30
      %p32 = scmp.ne.s32.totalorder %s24, %s27
      %p33 = scmp.eq.s32.totalorder %s14, 0
      %p34 = por %p32, %p33
      %p35 = scmp.ne.s32.totalorder %s24, %s27
      %p36 = scmp.eq.s32.totalorder %s19, 1
      %p37 = por %p35, %p36
      %p38 = scmp.ne.s32.totalorder %s27, %s28
      %p39 = scmp.eq.s32.totalorder %s19, 0
      %p40 = por %p38, %p39
      %p41 = scmp.ne.s32.totalorder %s27, %s28
      %p42 = scmp.eq.s32.totalorder %s20, 1
      %p43 = por %p41, %p42
      %p45 = scmp.ne.s32.totalorder %s28, %s44
      %p46 = scmp.eq.s32.totalorder %s20, 0
      %p47 = por %p45, %p46
      %s49 = sadd.s32 %s48, 1
      %p52 = scmp.eq.s32.totalorder %s14, 1
      %p53 = scmp.ne.s32.totalorder %s48, %s50
      %p54 = scmp.eq.s32.totalorder %s14, 0
      %p55 = por %p53, %p54
      %p56 = scmp.ne.s32.totalorder %s48, %s50
      %p57 = scmp.eq.s32.totalorder %s19, 1
      %p58 = por %p56, %p57
      %p59 = scmp.ne.s32.totalorder %s50, %s51
      %p60 = scmp.eq.s32.totalorder %s19, 0
      %p61 = por %p59, %p60
      %p62 = scmp.ne.s32.totalorder %s50, %s51
      %p63 = scmp.eq.s32.totalorder %s20, 1
      %p64 = por %p62, %p63
      %p66 = scmp.ne.s32.totalorder %s51, %s65
      %p67 = scmp.eq.s32.totalorder %s20, 0
      %p68 = por %p66, %p67
      %s70 = sadd.s32 %s69, 1
      %p73 = scmp.eq.s32.totalorder %s14, 1
      %p74 = scmp.ne.s32.totalorder %s69, %s71
      %p75 = scmp.eq.s32.totalorder %s14, 0
      %p76 = por %p74, %p75
      %p77 = scmp.ne.s32.totalorder %s69, %s71
      %p78 = scmp.eq.s32.totalorder %s19, 1
      %p79 = por %p77, %p78
      %p80 = scmp.ne.s32.totalorder %s71, %s72
      %p81 = scmp.eq.s32.totalorder %s19, 0
      %p82 = por %p80, %p81
      %p83 = scmp.ne.s32.totalorder %s71, %s72
      %p84 = scmp.eq.s32.totalorder %s20, 1
      %p85 = por %p83, %p84
      %p87 = scmp.ne.s32.totalorder %s72, %s86
      %p88 = scmp.eq.s32.totalorder %s20, 0
      %p89 = por %p87, %p88
      %s91 = sadd.s32 %s90, 1
      %p94 = scmp.eq.s32.totalorder %s14, 1
      %p95 = scmp.ne.s32.totalorder %s90, %s92
      %p96 = scmp.eq.s32.totalorder %s14, 0
      %p97 = por %p95, %p96
      %p98 = scmp.ne.s32.totalorder %s90, %s92
      %p99 = scmp.eq.s32.totalorder %s19, 1
      %p100 = por %p98, %p99
      %p101 = scmp.ne.s32.totalorder %s92, %s93
      %p102 = scmp.eq.s32.totalorder %s19, 0
      %p103 = por %p101, %p102
      %p104 = scmp.ne.s32.totalorder %s92, %s93
      %p105 = scmp.eq.s32.totalorder %s20, 1
      %p106 = por %p104, %p105
      %p108 = scmp.ne.s32.totalorder %s93, %s107
      %p109 = scmp.eq.s32.totalorder %s20, 0
      %p110 = por %p108, %p109
      %s111 = ssub.s32 %s14, %s21
      %p112 = scmp.eq.s32.totalorder %s111, 0
      %s114 = sadd.s32 %s113, 1
      %s115 = scalar_select %p112, %s113, %s114
      %p118 = pneg %p112
      %p119 = scmp.eq.s32.totalorder %s14, 1
      %p120 = por %p118, %p119
      %p121 = scmp.ne.s32.totalorder %s113, %s116
      %p122 = scmp.eq.s32.totalorder %s14, 0
      %p123 = por %p121, %p122
      %p124 = scmp.ne.s32.totalorder %s113, %s116
      %p125 = scmp.eq.s32.totalorder %s19, 1
      %p126 = por %p124, %p125
      %p127 = scmp.ne.s32.totalorder %s116, %s117
      %p128 = scmp.eq.s32.totalorder %s19, 0
      %p129 = por %p127, %p128
      %p130 = scmp.ne.s32.totalorder %s116, %s117
      %p131 = scmp.eq.s32.totalorder %s20, 1
      %p132 = por %p130, %p131
      %p134 = scmp.ne.s32.totalorder %s117, %s133
      %p135 = scmp.eq.s32.totalorder %s20, 0
      %p136 = por %p134, %p135
      %p137 = scmp.le.s32.totalorder 1, %s14
      %p138 = scmp.lt.s32.totalorder %s14, 3
      %p139 = pnand %p137, %p138
      %p140 = pneg %p139
      // Predicated region
      $region9: #{tpu_custom_call.1} parent=5 // pred_check
        _
      $region10: #{tpu_custom_call.1} parent=5 // pred_check_branch
        %142 = sbr.rel (%p139) target = $region12
      $region11: #{tpu_custom_call.1} parent=5 // pred_region
        %s143 = ssub.s32 %s14, 1
        // Predicated region
        $region13: #{tpu_custom_call.1} parent=11 // pred_check
          %p144 = pneg %p61
        $region14: #{tpu_custom_call.1} parent=11 // pred_check_branch
          %146 = sbr.rel (%p144) target = $region16
        $region15: #{tpu_custom_call.1} parent=11 // pred_region
          %148 = vsyncadd [#allocation5], 0
          %s149 = sshll.u32 %s1, 4
          %s150 = int_to_ptr.hbm [resolvable:$true] %s149
          %s151 = sshll.u32 [#allocation4], 4
          %s152 = int_to_ptr.vmem [resolvable:$true] %s151
          %157 = dma.hbm_to_vmem [thread:$0]  %s150, 512, %s152, [#allocation5], 256, 256, 16
        $region16: #{tpu_custom_call.1} parent=11 // pred_fallthru
          _
        // Predicated region
        $region17: #{tpu_custom_call.1} parent=11 // pred_check
          %p158 = pneg %p82
        $region18: #{tpu_custom_call.1} parent=11 // pred_check_branch
          %160 = sbr.rel (%p158) target = $region20
        $region19: #{tpu_custom_call.1} parent=11 // pred_region
          _
        $region20: #{tpu_custom_call.1} parent=11 // pred_fallthru
          _
        // Predicated region
        $region21: #{tpu_custom_call.1} parent=11 // pred_check
          %p161 = pneg %p103
        $region22: #{tpu_custom_call.1} parent=11 // pred_check_branch
          %163 = sbr.rel (%p161) target = $region24
        $region23: #{tpu_custom_call.1} parent=11 // pred_region
          _
        $region24: #{tpu_custom_call.1} parent=11 // pred_fallthru
          _
      $region12: #{tpu_custom_call.1} parent=5 // pred_fallthru
        _
      %p164 = scmp.lt.s32.totalorder %s14, 2
      // Predicated region
      $region25: #{tpu_custom_call.1} parent=5 // pred_check
        %p165 = pneg %p164
      $region26: #{tpu_custom_call.1} parent=5 // pred_check_branch
        %167 = sbr.rel (%p165) target = $region28
      $region27: #{tpu_custom_call.1} parent=5 // pred_region
        // Predicated region
        $region29: #{tpu_custom_call.1} parent=27 // pred_check
          %p168 = pneg %p34
        $region30: #{tpu_custom_call.1} parent=27 // pred_check_branch
          %170 = sbr.rel (%p168) target = $region32
        $region31: #{tpu_custom_call.1} parent=27 // pred_region
          %s171 = sand.u32 %s24, 1
          %s172 = scalar_lea.sflag [#allocation3], %s171
          %s173 = sand.u32 %s24, 1
          %s174 = smul.addr %s173, 8
          %s175 = scalar_lea.vmem [#allocation2], %s174
          %177 = vsyncadd %s172, 0
          %s178 = smul.addr %s14, 8
          %s179 = scalar_lea.hbm %s0, %s178
          %s181 = sshll.u32 %s179, 4
          %s182 = int_to_ptr.hbm [resolvable:$true] %s181
          %s183 = sshll.u32 %s175, 4
          %s184 = int_to_ptr.vmem [resolvable:$true] %s183
          %186 = dma.hbm_to_vmem [thread:$0]  %s182, 128, %s184, %s172
        $region32: #{tpu_custom_call.1} parent=27 // pred_fallthru
          _
      $region28: #{tpu_custom_call.1} parent=5 // pred_fallthru
        _
      %p187 = scmp.le.s32.totalorder 1, %s14
      %p188 = scmp.lt.s32.totalorder %s14, 3
      %p189 = pnand %p187, %p188
      %p190 = pneg %p189
      // Predicated region
      $region33: #{tpu_custom_call.1} parent=5 // pred_check
        _
      $region34: #{tpu_custom_call.1} parent=5 // pred_check_branch
        %192 = sbr.rel (%p189) target = $region36
      $region35: #{tpu_custom_call.1} parent=5 // pred_region
        %s193 = ssub.s32 %s14, 1
        %s194 = sand.u32 %s27, 1
        %s195 = scalar_lea.sflag [#allocation3], %s194
        %s196 = sand.u32 %s27, 1
        %s197 = smul.addr %s196, 8
        %s198 = scalar_lea.vmem [#allocation2], %s197
        // Predicated region
        $region37: #{tpu_custom_call.1} parent=35 // pred_check
          %p199 = pneg %p40
        $region38: #{tpu_custom_call.1} parent=35 // pred_check_branch
          %201 = sbr.rel (%p199) target = $region40
        $region39: #{tpu_custom_call.1} parent=35 // pred_region
          %203 = dma.done %s195, 128
        $region40: #{tpu_custom_call.1} parent=35 // pred_fallthru
          _
        // Predicated region
        $region41: #{tpu_custom_call.1} parent=35 // pred_check
          %p204 = pneg %p61
        $region42: #{tpu_custom_call.1} parent=35 // pred_check_branch
          %206 = sbr.rel (%p204) target = $region44
        $region43: #{tpu_custom_call.1} parent=35 // pred_region
          %208 = dma.done [#allocation5], 512
        $region44: #{tpu_custom_call.1} parent=35 // pred_fallthru
          _
        %s209 = sand.u32 %s27, 1
        %s210 = scalar_lea.sflag [#allocation3], %s209
        %s211 = sand.u32 %s27, 1
        %s212 = smul.addr %s211, 8
        %s213 = scalar_lea.vmem [#allocation2], %s212
        %p214 = pneg %p40
        %p215 = pneg %p37
        %p216 = pneg %p61
        %p217 = pneg %p58
        %p218 = pneg %p82
        %p219 = pneg %p79
        %p220 = pneg %p103
        %p221 = pneg %p100
        %p222 = pneg %p129
        %p223 = pneg %p126
        %p224 = scmp.lt.s32.totalorder %s19, 1
        %s225 = scalar_select %p224, %s19, 1
        %s226 = smul.addr %s225, 8
        %s227 = scalar_lea.vmem %s4, %s226
        %p228 = scmp.lt.s32.totalorder %s19, 1
        %s229 = scalar_select %p228, %s19, 1
        %s230 = smul.addr %s229, 8
        %s231 = scalar_lea.vmem %s4, %s230
        %v232 = vld [vmem:[%s198] sm:$0xff]
        %v233 = vld [vmem:[#allocation4] sm:$0xff]
        %v234 = vld [vmem:[#allocation4 + $0x8] sm:$0xff]
        %v235 = vld [vmem:[#allocation4 + $0x10] sm:$0x1]
        %v236 = vld [vmem:[#allocation4 + $0x18] sm:$0x1]
        %vm237 = vcmask 72704
        %v239 = vsel %vm237, %v232, 0
        %vm241 = vcmask 1040384
        %v243 = vsel %vm241, %v235, 0
        %v246 = vsel %vm241, %v236, 0
        %248 = vmatpush.msra.mxu0 0.0
        %249 = vmatpush.msra.mxu0 0.0
        %250 = vmatpush.msra.mxu0 0.0
        %251 = vmatpush.msra.mxu0 0.0
        %252 = vmatpush.msra.mxu0 0.0
        %253 = vmatpush.msra.mxu0 0.0
        %254 = vmatpush.msra.mxu0 0.0
        %255 = vmatpush.msra.mxu0 0.0
        %256 = vmatpush.msra.mxu0 0.0
        %257 = vmatpush.msra.mxu0 0.0
        %258 = vmatpush.msra.mxu0 0.0
        %259 = vmatpush.msra.mxu0 0.0
        %260 = vmatpush.msra.mxu0 0.0
        %261 = vmatpush.msra.mxu0 0.0
        %262 = vmatpush.msra.mxu0 %v243
        %263 = vmatpush.msra.mxu0 %v233
        %264 = vmatmul.f32.gmra.mxu0 %v239
        %v265 = vpop.f32.mrf.mxu0
        %v266 = vadd.f32 0.0, %v265
        %267 = vdwg.mxu0
        %268 = vmatpush.msra.mxu0 0.0
        %269 = vmatpush.msra.mxu0 0.0
        %270 = vmatpush.msra.mxu0 0.0
        %271 = vmatpush.msra.mxu0 0.0
        %272 = vmatpush.msra.mxu0 0.0
        %273 = vmatpush.msra.mxu0 0.0
        %274 = vmatpush.msra.mxu0 0.0
        %275 = vmatpush.msra.mxu0 0.0
        %276 = vmatpush.msra.mxu0 0.0
        %277 = vmatpush.msra.mxu0 0.0
        %278 = vmatpush.msra.mxu0 0.0
        %279 = vmatpush.msra.mxu0 0.0
        %280 = vmatpush.msra.mxu0 0.0
        %281 = vmatpush.msra.mxu0 0.0
        %282 = vmatpush.msra.mxu0 %v246
        %283 = vmatpush.msra.mxu0 %v234
        %284 = vmatmul.f32.gmra.mxu0 %v239
        %v285 = vpop.f32.mrf.mxu0
        %v286 = vadd.f32 0.0, %v285
        %287 = vdwg.mxu0
        %v288 = vmin.f32 %v266, 0.0
        %v289 = vand.u32 2147483647, %v266
        %v290 = vsub.f32 0.0, %v289
        %v291 = vmul.f32 %v290, 1.442695
        %v292 = vpow.pop %v291
        %v293 = vadd.f32 %v292, 1.0
        %v294 = vlog2.pop %v293
        %v295 = vmul.f32 %v294, 0.6931472
        %v296 = vsub.f32 %v288, %v295
        %v297 = vld [vmem:[%s2] sm:$0xff]
        %v298 = vld [vmem:[%s2 + $0x8] sm:$0xff]
        %v299 = vld [vmem:[%s2 + $0x10] sm:$0xff]
        %v300 = vld [vmem:[%s2 + $0x18] sm:$0xff]
        %v301 = vld [vmem:[%s2 + $0x20] sm:$0xff]
        %v302 = vld [vmem:[%s2 + $0x28] sm:$0xff]
        %v303 = vld [vmem:[%s2 + $0x30] sm:$0xff]
        %v304 = vld [vmem:[%s2 + $0x38] sm:$0xff]
        %v305 = vld [vmem:[%s2 + $0x40] sm:$0xff]
        %v306 = vld [vmem:[%s2 + $0x48] sm:$0xff]
        %v307 = vld [vmem:[%s2 + $0x50] sm:$0xff]
        %v308 = vld [vmem:[%s2 + $0x58] sm:$0xff]
        %v309 = vld [vmem:[%s2 + $0x60] sm:$0xff]
        %v310 = vld [vmem:[%s2 + $0x68] sm:$0xff]
        %v311 = vld [vmem:[%s2 + $0x70] sm:$0xff]
        %v312 = vld [vmem:[%s2 + $0x78] sm:$0xff]
        %313 = vmatpush.msra.mxu0 %v312
        %314 = vmatpush.msra.mxu0 %v311
        %315 = vmatpush.msra.mxu0 %v310
        %316 = vmatpush.msra.mxu0 %v309
        %317 = vmatpush.msra.mxu0 %v308
        %318 = vmatpush.msra.mxu0 %v307
        %319 = vmatpush.msra.mxu0 %v306
        %320 = vmatpush.msra.mxu0 %v305
        %321 = vmatpush.msra.mxu0 %v304
        %322 = vmatpush.msra.mxu0 %v303
        %323 = vmatpush.msra.mxu0 %v302
        %324 = vmatpush.msra.mxu0 %v301
        %325 = vmatpush.msra.mxu0 %v300
        %326 = vmatpush.msra.mxu0 %v299
        %327 = vmatpush.msra.mxu0 %v298
        %328 = vmatpush.msra.mxu0 %v297
        %329 = vmatmul.f32.gmra.mxu0 %v296
        %v330 = vpop.f32.mrf.mxu0
        %v331 = vadd.f32 %v286, %v330
        %332 = vdwg.mxu0
        %v333 = vmul.f32 %v331, 1.442695
        %v334 = vpow.pop %v333
        %v335 = vld [vmem:[%s3] sm:$0xff]
        %v336 = vld [vmem:[%s3 + $0x8] sm:$0xff]
        %v337 = vld [vmem:[%s3 + $0x10] sm:$0xff]
        %v338 = vld [vmem:[%s3 + $0x18] sm:$0xff]
        %v339 = vld [vmem:[%s3 + $0x20] sm:$0xff]
        %v340 = vld [vmem:[%s3 + $0x28] sm:$0xff]
        %v341 = vld [vmem:[%s3 + $0x30] sm:$0xff]
        %v342 = vld [vmem:[%s3 + $0x38] sm:$0xff]
        %v343 = vld [vmem:[%s3 + $0x40] sm:$0xff]
        %v344 = vld [vmem:[%s3 + $0x48] sm:$0xff]
        %v345 = vld [vmem:[%s3 + $0x50] sm:$0xff]
        %v346 = vld [vmem:[%s3 + $0x58] sm:$0xff]
        %v347 = vld [vmem:[%s3 + $0x60] sm:$0xff]
        %v348 = vld [vmem:[%s3 + $0x68] sm:$0xff]
        %v349 = vld [vmem:[%s3 + $0x70] sm:$0xff]
        %v350 = vld [vmem:[%s3 + $0x78] sm:$0xff]
        %351 = vmatpush.msra.mxu0 %v350
        %352 = vmatpush.msra.mxu0 %v349
        %353 = vmatpush.msra.mxu0 %v348
        %354 = vmatpush.msra.mxu0 %v347
        %355 = vmatpush.msra.mxu0 %v346
        %356 = vmatpush.msra.mxu0 %v345
        %357 = vmatpush.msra.mxu0 %v344
        %358 = vmatpush.msra.mxu0 %v343
        %359 = vmatpush.msra.mxu0 %v342
        %360 = vmatpush.msra.mxu0 %v341
        %361 = vmatpush.msra.mxu0 %v340
        %362 = vmatpush.msra.mxu0 %v339
        %363 = vmatpush.msra.mxu0 %v338
        %364 = vmatpush.msra.mxu0 %v337
        %365 = vmatpush.msra.mxu0 %v336
        %366 = vmatpush.msra.mxu0 %v335
        %367 = vmatmul.f32.gmra.mxu0 %v334
        %v368 = vpop.f32.mrf.mxu0
        %v369 = vadd.f32 0.0, %v368
        %370 = vdwg.mxu0
        %vm371 = vcmask 31744
        %372 = vst.msk [vmem:[%s231] sm:$0xff] %vm371, %v369
        %p373 = scmp.lt.s32.totalorder %s19, 1
        %s374 = scalar_select %p373, %s19, 1
        %s375 = smul.addr %s374, 8
        %s376 = scalar_lea.vmem %s4, %s375
        // Predicated region
        $region45: #{tpu_custom_call.1} parent=35 // pred_check
          %p377 = pneg %p126
        $region46: #{tpu_custom_call.1} parent=35 // pred_check_branch
          %379 = sbr.rel (%p377) target = $region48
        $region47: #{tpu_custom_call.1} parent=35 // pred_region
          _
        $region48: #{tpu_custom_call.1} parent=35 // pred_fallthru
          _
      $region36: #{tpu_custom_call.1} parent=5 // pred_fallthru
        _
      %p380 = scmp.le.s32.totalorder 2, %s14
      // Predicated region
      $region49: #{tpu_custom_call.1} parent=5 // pred_check
        %p381 = pneg %p380
      $region50: #{tpu_custom_call.1} parent=5 // pred_check_branch
        %383 = sbr.rel (%p381) target = $region52
      $region51: #{tpu_custom_call.1} parent=5 // pred_region
        %s384 = ssub.s32 %s14, 2
        // Predicated region
        $region53: #{tpu_custom_call.1} parent=51 // pred_check
          %p385 = pneg %p132
        $region54: #{tpu_custom_call.1} parent=51 // pred_check_branch
          %387 = sbr.rel (%p385) target = $region56
        $region55: #{tpu_custom_call.1} parent=51 // pred_region
          %p388 = scmp.lt.s32.totalorder %s20, 1
          %s389 = scalar_select %p388, %s20, 1
          %s390 = smul.addr %s389, 8
          %s391 = scalar_lea.vmem %s4, %s390
        $region56: #{tpu_custom_call.1} parent=51 // pred_fallthru
          _
      $region52: #{tpu_custom_call.1} parent=5 // pred_fallthru
        _
    $region6: #{tpu_custom_call.1} parent=1 // loop_footer
      %s18 = sadd.s32 1, %s14
    $region7: #{tpu_custom_call.1} parent=1 // loop_footer_branch
      %13 = sbr.rel target = $region3
    $region8: #{tpu_custom_call.1} parent=1 // loop_exit
      _
    %392 = vsyncpa [#allocation3], 1
    %s393 = scalar_lea.sflag [#allocation3], 1
    %394 = vsyncpa %s393, 1
    %395 = vsyncpa [#allocation5], 1

</llo_original>
